<compile_context>
chip_gen: v7x
topology: tpu7x:2x2x1
jax: 0.10.0
libtpu: 0.0.40
codegen_flags: <defaults>
</compile_context>

<pallas_src>
import math

import jax
import jax.numpy as jnp
from jax import lax
from jax.experimental import pallas as pl
from jax.experimental.pallas import tpu as pltpu

LN_EPS = 1e-5  # PyTorch nn.LayerNorm default
_INV_SQRT2 = 1.0 / math.sqrt(2.0)
_SQRT_2_OVER_PI = math.sqrt(2.0 / math.pi)


# ----------------------------------------------------------------------------
# Kernel
# ----------------------------------------------------------------------------
def _make_ffn_kernel(approx_gelu: bool):
    def kernel(x_ref, gamma_ref, beta_ref, w1_ref, b1_ref, w2_ref, b2_ref,
               o_ref, xn_ref, acc_ref):
        h_idx = pl.program_id(1)
        n_h = pl.num_programs(1)

        # ---- hidden-chunk 0: LayerNorm (f32 stats) + accumulator init ----
        @pl.when(h_idx == 0)
        def _():
            x = x_ref[...].astype(jnp.float32)                     # (TM, D)
            mean = jnp.mean(x, axis=-1, keepdims=True)
            cen = x - mean
            var = jnp.mean(cen * cen, axis=-1, keepdims=True)
            xn = cen * lax.rsqrt(var + LN_EPS)
            xn = xn * gamma_ref[...].astype(jnp.float32) \
                 + beta_ref[...].astype(jnp.float32)
            xn_ref[...] = xn.astype(xn_ref.dtype)                   # MXU operand dtype
            acc_ref[...] = jnp.zeros_like(acc_ref)

        # ---- Linear(dim -> hidden) chunk: (TM, D) @ (D, TH), f32 accumulate ----
        h = jnp.dot(xn_ref[...], w1_ref[...], preferred_element_type=jnp.float32)
        h = h + b1_ref[...].astype(jnp.float32)

        # ---- GELU ----
        if approx_gelu:
            # tanh approximation -> routes to the (otherwise idle) EUP slot.
            h = 0.5 * h * (1.0 + jnp.tanh(_SQRT_2_OVER_PI * (h + 0.044715 * h * h * h)))
        else:
            # exact erf-based GELU: matches nn.GELU() default semantics.
            h = 0.5 * h * (1.0 + lax.erf(h * _INV_SQRT2))

        # ---- Linear(hidden -> dim) chunk: (TM, TH) @ (TH, D), f32 accumulate ----
        acc_ref[...] += jnp.dot(h.astype(w2_ref.dtype), w2_ref[...],
                                preferred_element_type=jnp.float32)

        # ---- last hidden chunk: add b2 once, write the output tile ----
        @pl.when(h_idx == n_h - 1)
        def _():
            o_ref[...] = (acc_ref[...]
                          + b2_ref[...].astype(jnp.float32)).astype(o_ref.dtype)

    return kernel


# ----------------------------------------------------------------------------
# Tiling helpers
# ----------------------------------------------------------------------------
def _round_up(a, b):
    return (a + b - 1) // b * b


def _divisor_tile(H, target):
    """Largest multiple of 128 <= target that divides H; falls back to H."""
    if target is None or target >= H or H % 128 != 0:
        return H
    t = (max(target, 128) // 128) * 128
    while t >= 128:
        if H % t == 0:
            return t
        t -= 128
    return H


def _shrink_th(H, th):
    """Next smaller multiple of 128 that divides H, or None if none exists."""
    t = th - 128
    while t >= 128:
        if H % t == 0:
            return t
        t -= 128
    return None


def _vmem_bytes(tm, th, D, x_it, w_it, o_it, c_it):
    """Estimated VMEM footprint of one pipelined step (incl. intermediates)."""
    return int(
        2 * tm * D * x_it                 # x tiles (double-buffered)
        + 2 * tm * D * o_it               # output tiles (double-buffered)
        + 2 * (D * th + th * D) * w_it    # W1 / W2 chunks (double-buffered)
        + 2 * (th + 3 * D) * w_it         # b1 chunk + gamma/beta/b2
        + tm * D * c_it                   # xn scratch (LN output cache)
        + tm * D * 4                      # f32 accumulator scratch
        + tm * th * (4 + c_it)            # f32 matmul-1 output + operand cast
    )


# ----------------------------------------------------------------------------
# Wrapper
# ----------------------------------------------------------------------------
def feed_forward(x, gamma, beta, w1, b1, w2, b2, *, tm=None, th=None,
                 operand_dtype=None, approx_gelu=False):
    """x: (batch, seq, dim).  Returns (batch, seq, dim)."""
    B, S, D = x.shape
    H = w1.shape[1]
    M = B * S

    # MXU operand dtype.  Default keeps w1.dtype (exact for f32 weights); pass
    # operand_dtype=jnp.bfloat16 for the fast path (f32 accumulation retained).
    compute_dtype = jnp.dtype(operand_dtype) if operand_dtype is not None \
        else jnp.dtype(w1.dtype)
    if operand_dtype is not None:
        w1 = w1.astype(compute_dtype)
        w2 = w2.astype(compute_dtype)

    x_it = jnp.dtype(x.dtype).itemsize
    o_it = x_it
    w_it = jnp.dtype(w1.dtype).itemsize
    c_it = jnp.dtype(compute_dtype).itemsize

    # Sublane packing of the row axis (bf16 packs 2 rows per 32-bit sublane).
    row_align = max(8, 32 // min(x_it, c_it, o_it))

    # Generation-aware VMEM capacity (v5e/v6e: 128 MiB, v7x: 64 MiB per TC).
    try:
        vmem_cap = int(pltpu.get_tpu_info().vmem_capacity_bytes)
    except Exception:
        vmem_cap = 64 * 1024 * 1024
    budget = int(0.78 * vmem_cap)

    # Row-tile target: tall LHS tiles raise the FLOPs/byte of re-streamed
    # weight chunks past the HBM/MXU crossover.  ~1024 on 128-MiB chips,
    # ~512 on 64-MiB chips; clamp so both megacore cores get >= 1 row tile.
    tm_target = tm if tm is not None else (1024 if vmem_cap >= 96 * 1024 * 1024 else 512)
    two_way = _round_up(-(-M // 2), row_align)
    tm_eff = max(row_align, min(_round_up(tm_target, row_align), two_way))

    # Hidden tile: prefer fully VMEM-resident weights (th = H) so W1/W2 are
    # DMA'd exactly once per call; shrink only if the budget demands it.
    th_eff = H if th is None else _divisor_tile(H, th)

    while _vmem_bytes(tm_eff, th_eff, D, x_it, w_it, o_it, c_it) > budget:
        nt = _shrink_th(H, th_eff) if th_eff > 512 else None
        if nt is not None:
            th_eff = nt                   # keep the chunk coarse (>= 512) first
        elif tm_eff > row_align:
            tm_eff = max(row_align, _round_up(tm_eff // 2, row_align))
        else:
            nt = _shrink_th(H, th_eff)
            if nt is None:
                break
            th_eff = nt

    vmem_needed = _vmem_bytes(tm_eff, th_eff, D, x_it, w_it, o_it, c_it)
    # Target ~82% of physical VMEM (≈52 MiB on v7x, ≈105 MiB on v5e/v6e),
    # leaving headroom for compiler-internal scratch.
    vmem_limit = min(int(0.82 * vmem_cap),
                     max(32 << 20, int(1.25 * vmem_needed) + (4 << 20)))
    vmem_limit = min(max(vmem_limit, vmem_needed + (1 << 20)), vmem_cap)

    # No wrapper pad/slice: ragged last row tile is handled by Pallas boundary
    # masking (garbage rows stay row-local through LN/matmuls; store is masked).
    x2d = x.reshape(M, D)
    gamma2 = gamma.reshape(1, D)
    beta2 = beta.reshape(1, D)
    b1_2 = b1.reshape(1, H)
    b2_2 = b2.reshape(1, D)

    grid = (pl.cdiv(M, tm_eff), H // th_eff)
    n_row_tiles = grid[0]

    weight_bytes = 2 * D * H * w_it
    weight_stream = weight_bytes if th_eff == H else n_row_tiles * weight_bytes
    cost = pl.CostEstimate(
        flops=4 * M * D * H,                       # two matmuls
        transcendentals=M * H,                     # GELU
        bytes_accessed=int(M * D * (x_it + o_it) + weight_stream + (3 * D + H) * w_it),
    )

    out2d = pl.pallas_call(
        _make_ffn_kernel(approx_gelu),
        out_shape=jax.ShapeDtypeStruct((M, D), x.dtype),
        grid_spec=pltpu.PrefetchScalarGridSpec(
            num_scalar_prefetch=0,
            grid=grid,
            in_specs=[
                pl.BlockSpec((tm_eff, D), lambda i, h: (i, 0)),    # x rows
                pl.BlockSpec((1, D), lambda i, h: (0, 0)),         # LN gamma
                pl.BlockSpec((1, D), lambda i, h: (0, 0)),         # LN beta
                pl.BlockSpec((D, th_eff), lambda i, h: (0, h)),    # W1 chunk
                pl.BlockSpec((1, th_eff), lambda i, h: (0, h)),    # b1 chunk
                pl.BlockSpec((th_eff, D), lambda i, h: (h, 0)),    # W2 chunk
                pl.BlockSpec((1, D), lambda i, h: (0, 0)),         # b2
            ],
            out_specs=pl.BlockSpec((tm_eff, D), lambda i, h: (i, 0)),
            scratch_shapes=[
                pltpu.VMEM((tm_eff, D), compute_dtype),            # cached LN output
                pltpu.VMEM((tm_eff, D), jnp.float32),              # f32 accumulator
            ],
        ),
        compiler_params=pltpu.CompilerParams(
            dimension_semantics=("parallel", "arbitrary"),
            vmem_limit_bytes=vmem_limit,
        ),
        cost_estimate=cost,
    )(x2d, gamma2, beta2, w1, b1_2, w2, b2_2)

    return out2d.reshape(B, S, D)


# ----------------------------------------------------------------------------
# Pure-JAX reference (mirrors the PyTorch module forward)
# ----------------------------------------------------------------------------
def reference(x, gamma, beta, w1, b1, w2, b2):
    xf = x.astype(jnp.float32)
    mean = jnp.mean(xf, axis=-1, keepdims=True)
    var = jnp.mean((xf - mean) ** 2, axis=-1, keepdims=True)
    xn = (xf - mean) / jnp.sqrt(var + LN_EPS) * gamma + beta
    h = xn @ w1 + b1
    h = 0.5 * h * (1.0 + lax.erf(h / math.sqrt(2.0)))
    return (h @ w2 + b2).astype(x.dtype)


if __name__ == "__main__":
    # Small shapes consistent with the module (tokens of width `dim`).
    B, S, D, H = 2, 8, 128, 256

    key = jax.random.PRNGKey(0)
    kx, kxr, kw1, kb1, kw2, kb2 = jax.random.split(key, 6)

    x = jax.random.normal(kx, (B, S, D), dtype=jnp.float32)

    # LayerNorm params: PyTorch default init (ones / zeros)
    gamma = jnp.ones((D,), dtype=jnp.float32)
    beta = jnp.zeros((D,), dtype=jnp.float32)

    # Linear params: deterministic uniform init (PyTorch-style bounds)
    bound1 = 1.0 / math.sqrt(D)
    w1 = jax.random.uniform(kw1, (D, H), minval=-bound1, maxval=bound1, dtype=jnp.float32)
    b1 = jax.random.uniform(kb1, (H,), minval=-bound1, maxval=bound1, dtype=jnp.float32)
    bound2 = 1.0 / math.sqrt(H)
    w2 = jax.random.uniform(kw2, (H, D), minval=-bound2, maxval=bound2, dtype=jnp.float32)
    b2 = jax.random.uniform(kb2, (D,), minval=-bound2, maxval=bound2, dtype=jnp.float32)

    ref = reference(x, gamma, beta, w1, b1, w2, b2)

    # TPU MXU matmuls run at the backend's default (reduced) precision both in
    # the kernel and in the XLA reference; compare at a tolerance that covers
    # that while still catching structural errors (which are O(0.1-1)).
    TOL = dict(atol=1e-2, rtol=1e-2)

    # 1) Small explicit tiles: exercises the multi-step grid (2 row tiles x
    #    2 hidden chunks), the LN cache and accumulator init/finalize paths.
    out = jax.block_until_ready(
        feed_forward(x, gamma, beta, w1, b1, w2, b2, tm=8, th=128))
    assert out.shape == (B, S, D)
    assert bool(jnp.allclose(out, ref, **TOL)), "mismatch vs reference (tiled path)"

    # 2) Auto tiles: generation-aware tm + weight-resident (th = H) path.
    out2 = jax.block_until_ready(feed_forward(x, gamma, beta, w1, b1, w2, b2))
    assert bool(jnp.allclose(out2, ref, **TOL)), "mismatch vs reference (auto tiles)"

    # 3) Ragged rows (M % tm != 0): no wrapper pad/slice, relies on Pallas
    #    boundary masking of the last row tile.
    xr = jax.random.normal(kxr, (2, 7, D), dtype=jnp.float32)
    refr = reference(xr, gamma, beta, w1, b1, w2, b2)
    outr = jax.block_until_ready(
        feed_forward(xr, gamma, beta, w1, b1, w2, b2, tm=8, th=128))
    assert outr.shape == (2, 7, D)
    assert bool(jnp.allclose(outr, refr, **TOL)), "mismatch vs reference (ragged rows)"

    # 4) bf16 operand fast path (perf configuration) at a looser tolerance.
    outb = jax.block_until_ready(
        feed_forward(x, gamma, beta, w1, b1, w2, b2, operand_dtype=jnp.bfloat16))
    assert bool(jnp.allclose(outb.astype(jnp.float32), ref, atol=5e-2, rtol=5e-2)), \
        "mismatch vs reference (bf16 operands)"

    print("KERNEL_OK")
</pallas_src>

<mosaic_0001>
module attributes {stable_mosaic.version = 11 : i64} {
  func.func @kernel(%arg0: i32, %arg1: i32, %arg2: memref<8x128xf32, #tpu.memory_space<vmem>>, %arg3: memref<1x128xf32, #tpu.memory_space<vmem>>, %arg4: memref<1x128xf32, #tpu.memory_space<vmem>>, %arg5: memref<128x128xf32, #tpu.memory_space<vmem>>, %arg6: memref<1x128xf32, #tpu.memory_space<vmem>>, %arg7: memref<128x128xf32, #tpu.memory_space<vmem>>, %arg8: memref<1x128xf32, #tpu.memory_space<vmem>>, %arg9: memref<8x128xf32, #tpu.memory_space<vmem>>, %arg10: memref<8x128xf32, #tpu.memory_space<vmem>>, %arg11: memref<8x128xf32, #tpu.memory_space<vmem>>) attributes {dimension_semantics = [#tpu.dimension_semantics<parallel>, #tpu.dimension_semantics<arbitrary>], iteration_bounds = array<i64: 2, 2>, scalar_prefetch = 0 : i64, scratch_operands = 2 : i64, tpu.core_type = #tpu.core_type<tc>, window_params = [{transform_indices = @transform_0, window_bounds = array<i64: 8, 128>}, {pipeline_mode = #tpu.pipeline_mode<synchronous>, transform_indices = @transform_1, window_bounds = array<i64: 1, 128>}, {pipeline_mode = #tpu.pipeline_mode<synchronous>, transform_indices = @transform_2, window_bounds = array<i64: 1, 128>}, {transform_indices = @transform_3, window_bounds = array<i64: 128, 128>}, {transform_indices = @transform_4, window_bounds = array<i64: 1, 128>}, {transform_indices = @transform_5, window_bounds = array<i64: 128, 128>}, {pipeline_mode = #tpu.pipeline_mode<synchronous>, transform_indices = @transform_6, window_bounds = array<i64: 1, 128>}, {transform_indices = @transform_7, window_bounds = array<i64: 8, 128>}]} {
    %c0_i32 = arith.constant 0 : i32
    %0 = arith.cmpi eq, %arg1, %c0_i32 : i32
    %1 = arith.extui %0 : i1 to i32
    %c0_i32_0 = arith.constant 0 : i32
    %2 = arith.cmpi ne, %1, %c0_i32_0 : i32
    scf.if %2 {
      %c0_17 = arith.constant 0 : index
      %c0_18 = arith.constant 0 : index
      %25 = vector.load %arg2[%c0_17, %c0_18] : memref<8x128xf32, #tpu.memory_space<vmem>>, vector<8x128xf32>
      %cst_19 = arith.constant dense<0.000000e+00> : vector<8xf32>
      %26 = vector.multi_reduction <add>, %25, %cst_19 [1] : vector<8x128xf32> to vector<8xf32>
      %27 = vector.shape_cast %26 : vector<8xf32> to vector<8x1xf32>
      %cst_20 = arith.constant 1.280000e+02 : f32
      %28 = vector.broadcast %cst_20 : f32 to vector<8x1xf32>
      %29 = arith.divf %27, %28 : vector<8x1xf32>
      %30 = vector.broadcast %29 : vector<8x1xf32> to vector<8x128xf32>
      %31 = arith.subf %25, %30 : vector<8x128xf32>
      %32 = arith.mulf %31, %31 : vector<8x128xf32>
      %cst_21 = arith.constant dense<0.000000e+00> : vector<8xf32>
      %33 = vector.multi_reduction <add>, %32, %cst_21 [1] : vector<8x128xf32> to vector<8xf32>
      %34 = vector.shape_cast %33 : vector<8xf32> to vector<8x1xf32>
      %cst_22 = arith.constant 1.280000e+02 : f32
      %35 = vector.broadcast %cst_22 : f32 to vector<8x1xf32>
      %36 = arith.divf %34, %35 : vector<8x1xf32>
      %cst_23 = arith.constant 9.99999974E-6 : f32
      %37 = vector.broadcast %cst_23 : f32 to vector<8x1xf32>
      %38 = arith.addf %36, %37 : vector<8x1xf32>
      %39 = math.rsqrt %38 : vector<8x1xf32>
      %40 = vector.broadcast %39 : vector<8x1xf32> to vector<8x128xf32>
      %41 = arith.mulf %31, %40 : vector<8x128xf32>
      %c0_24 = arith.constant 0 : index
      %c0_25 = arith.constant 0 : index
      %42 = vector.load %arg3[%c0_24, %c0_25] : memref<1x128xf32, #tpu.memory_space<vmem>>, vector<1x128xf32>
      %43 = vector.broadcast %42 : vector<1x128xf32> to vector<8x128xf32>
      %44 = arith.mulf %41, %43 : vector<8x128xf32>
      %c0_26 = arith.constant 0 : index
      %c0_27 = arith.constant 0 : index
      %45 = vector.load %arg4[%c0_26, %c0_27] : memref<1x128xf32, #tpu.memory_space<vmem>>, vector<1x128xf32>
      %46 = vector.broadcast %45 : vector<1x128xf32> to vector<8x128xf32>
      %47 = arith.addf %44, %46 : vector<8x128xf32>
      %c0_28 = arith.constant 0 : index
      %c0_29 = arith.constant 0 : index
      %48 = vector.load %arg10[%c0_28, %c0_29] : memref<8x128xf32, #tpu.memory_space<vmem>>, vector<8x128xf32>
      tpu.vector_store %arg10[%c0_28, %c0_29], %47 {strides = array<i32>} : memref<8x128xf32, #tpu.memory_space<vmem>>, vector<8x128xf32>,
      %cst_30 = arith.constant 0.000000e+00 : f32
      %49 = vector.broadcast %cst_30 : f32 to vector<8x128xf32>
      %c0_31 = arith.constant 0 : index
      %c0_32 = arith.constant 0 : index
      %50 = vector.load %arg11[%c0_31, %c0_32] : memref<8x128xf32, #tpu.memory_space<vmem>>, vector<8x128xf32>
      tpu.vector_store %arg11[%c0_31, %c0_32], %49 {strides = array<i32>} : memref<8x128xf32, #tpu.memory_space<vmem>>, vector<8x128xf32>,
    } else {
    }
    %c0 = arith.constant 0 : index
    %c0_1 = arith.constant 0 : index
    %3 = vector.load %arg10[%c0, %c0_1] : memref<8x128xf32, #tpu.memory_space<vmem>>, vector<8x128xf32>
    %c0_2 = arith.constant 0 : index
    %c0_3 = arith.constant 0 : index
    %4 = vector.load %arg5[%c0_2, %c0_3] : memref<128x128xf32, #tpu.memory_space<vmem>>, vector<128x128xf32>
    %cst = arith.constant dense<0.000000e+00> : vector<8x128xf32>
    %5 = tpu.matmul %3, %4, %cst {dimension_numbers = #tpu.dot_dimension_numbers<[1], [0], [0], [1], [0, 0, 1, 1], [], []>} : vector<8x128xf32>, vector<128x128xf32>, vector<8x128xf32> -> vector<8x128xf32>
    %c0_4 = arith.constant 0 : index
    %c0_5 = arith.constant 0 : index
    %6 = vector.load %arg6[%c0_4, %c0_5] : memref<1x128xf32, #tpu.memory_space<vmem>>, vector<1x128xf32>
    %7 = vector.broadcast %6 : vector<1x128xf32> to vector<8x128xf32>
    %8 = arith.addf %5, %7 : vector<8x128xf32>
    %cst_6 = arith.constant 5.000000e-01 : f32
    %9 = vector.broadcast %cst_6 : f32 to vector<8x128xf32>
    %10 = arith.mulf %9, %8 : vector<8x128xf32>
    %cst_7 = arith.constant 0.707106769 : f32
    %11 = vector.broadcast %cst_7 : f32 to vector<8x128xf32>
    %12 = arith.mulf %8, %11 : vector<8x128xf32>
    %13 = math.erf %12 : vector<8x128xf32>
    %cst_8 = arith.constant 1.000000e+00 : f32
    %14 = vector.broadcast %cst_8 : f32 to vector<8x128xf32>
    %15 = arith.addf %14, %13 : vector<8x128xf32>
    %16 = arith.mulf %10, %15 : vector<8x128xf32>
    %c0_9 = arith.constant 0 : index
    %c0_10 = arith.constant 0 : index
    %17 = vector.load %arg11[%c0_9, %c0_10] : memref<8x128xf32, #tpu.memory_space<vmem>>, vector<8x128xf32>
    %c0_11 = arith.constant 0 : index
    %c0_12 = arith.constant 0 : index
    %18 = vector.load %arg7[%c0_11, %c0_12] : memref<128x128xf32, #tpu.memory_space<vmem>>, vector<128x128xf32>
    %cst_13 = arith.constant dense<0.000000e+00> : vector<8x128xf32>
    %19 = tpu.matmul %16, %18, %cst_13 {dimension_numbers = #tpu.dot_dimension_numbers<[1], [0], [0], [1], [0, 0, 1, 1], [], []>} : vector<8x128xf32>, vector<128x128xf32>, vector<8x128xf32> -> vector<8x128xf32>
    %20 = arith.addf %17, %19 : vector<8x128xf32>
    %c0_14 = arith.constant 0 : index
    %c0_15 = arith.constant 0 : index
    %21 = vector.load %arg11[%c0_14, %c0_15] : memref<8x128xf32, #tpu.memory_space<vmem>>, vector<8x128xf32>
    tpu.vector_store %arg11[%c0_14, %c0_15], %20 {strides = array<i32>} : memref<8x128xf32, #tpu.memory_space<vmem>>, vector<8x128xf32>,
    %c1_i32 = arith.constant 1 : i32
    %22 = arith.cmpi eq, %arg1, %c1_i32 : i32
    %23 = arith.extui %22 : i1 to i32
    %c0_i32_16 = arith.constant 0 : i32
    %24 = arith.cmpi ne, %23, %c0_i32_16 : i32
    scf.if %24 {
      %c0_17 = arith.constant 0 : index
      %c0_18 = arith.constant 0 : index
      %25 = vector.load %arg11[%c0_17, %c0_18] : memref<8x128xf32, #tpu.memory_space<vmem>>, vector<8x128xf32>
      %c0_19 = arith.constant 0 : index
      %c0_20 = arith.constant 0 : index
      %26 = vector.load %arg8[%c0_19, %c0_20] : memref<1x128xf32, #tpu.memory_space<vmem>>, vector<1x128xf32>
      %27 = vector.broadcast %26 : vector<1x128xf32> to vector<8x128xf32>
      %28 = arith.addf %25, %27 : vector<8x128xf32>
      %c0_21 = arith.constant 0 : index
      %c0_22 = arith.constant 0 : index
      %29 = vector.load %arg9[%c0_21, %c0_22] : memref<8x128xf32, #tpu.memory_space<vmem>>, vector<8x128xf32>
      tpu.vector_store %arg9[%c0_21, %c0_22], %28 {strides = array<i32>} : memref<8x128xf32, #tpu.memory_space<vmem>>, vector<8x128xf32>,
    } else {
    }
    return
  }
  func.func @transform_0(%arg0: i32, %arg1: i32) -> (i32, i32) {
    %c0_i32 = arith.constant 0 : i32
    %c0_i32_0 = arith.constant 0 : i32
    return %arg0, %c0_i32 : i32, i32
  }
  func.func @transform_1(%arg0: i32, %arg1: i32) -> (i32, i32) {
    %c0_i32 = arith.constant 0 : i32
    %c0_i32_0 = arith.constant 0 : i32
    %c0_i32_1 = arith.constant 0 : i32
    return %c0_i32, %c0_i32_0 : i32, i32
  }
  func.func @transform_2(%arg0: i32, %arg1: i32) -> (i32, i32) {
    %c0_i32 = arith.constant 0 : i32
    %c0_i32_0 = arith.constant 0 : i32
    %c0_i32_1 = arith.constant 0 : i32
    return %c0_i32, %c0_i32_0 : i32, i32
  }
  func.func @transform_3(%arg0: i32, %arg1: i32) -> (i32, i32) {
    %c0_i32 = arith.constant 0 : i32
    %c0_i32_0 = arith.constant 0 : i32
    return %c0_i32, %arg1 : i32, i32
  }
  func.func @transform_4(%arg0: i32, %arg1: i32) -> (i32, i32) {
    %c0_i32 = arith.constant 0 : i32
    %c0_i32_0 = arith.constant 0 : i32
    return %c0_i32, %arg1 : i32, i32
  }
  func.func @transform_5(%arg0: i32, %arg1: i32) -> (i32, i32) {
    %c0_i32 = arith.constant 0 : i32
    %c0_i32_0 = arith.constant 0 : i32
    return %arg1, %c0_i32 : i32, i32
  }
  func.func @transform_6(%arg0: i32, %arg1: i32) -> (i32, i32) {
    %c0_i32 = arith.constant 0 : i32
    %c0_i32_0 = arith.constant 0 : i32
    %c0_i32_1 = arith.constant 0 : i32
    return %c0_i32, %c0_i32_0 : i32, i32
  }
  func.func @transform_7(%arg0: i32, %arg1: i32) -> (i32, i32) {
    %c0_i32 = arith.constant 0 : i32
    %c0_i32_0 = arith.constant 0 : i32
    return %arg0, %c0_i32 : i32, i32
  }
}

</mosaic_0001>

<llo_original>
// kernel: tpu_custom_call.1
$region0: #{tpu_custom_call.1}
  #allocation0 [shape = 'u32[]', space=smem, size = 0x4, offset = 0x4, fixed_abs, tag = 'smem constant byte address 0x4 - core index']
  #allocation1 [shape = 'u32[144,128]{1,0:T(1,128)}', space=vmem, size = 0x12000, scoped, tag = 'internal scratch']
  #allocation2 [shape = 'f32[8,128]{1,0:T(8,128)}', space=vmem, size = 0x1000, scoped, tag = 'scratch operand']
  #allocation3 [shape = 'f32[8,128]{1,0:T(8,128)}', space=vmem, size = 0x1000, scoped, tag = 'scratch operand']
  %s0 = inlined_call_operand.hbm [shape: f32[16,128], index: 0, kind: input, shape index: {}]
  %s1 = inlined_call_operand.vmem [shape: f32[1,128], index: 1, kind: input, shape index: {}]
  %s2 = inlined_call_operand.vmem [shape: f32[1,128], index: 2, kind: input, shape index: {}]
  %s3 = inlined_call_operand.hbm [shape: f32[128,256], index: 3, kind: input, shape index: {}]
  %s4 = inlined_call_operand.vmem [shape: f32[1,256], index: 4, kind: input, shape index: {}]
  %s5 = inlined_call_operand.hbm [shape: f32[256,128], index: 5, kind: input, shape index: {}]
  %s6 = inlined_call_operand.vmem [shape: f32[1,128], index: 6, kind: input, shape index: {}]
  %s7 = inlined_call_operand.hbm [shape: f32[16,128], index: 7, kind: output, shape index: {}]
  %s8 = sld [smem:[#allocation0]]
  $region81: #{tpu_custom_call.1} parent=0
    _
  %s10 = ssub.s32 1, %s8
  %s11 = scalar_select 0, %s10, %s8
  $region1: #{tpu_custom_call.1} parent=0
    #allocation4 [shape = 'u8[8192]{0}', space=vmem, size = 0x2000, scoped, tag = 'input window, operand 0']
    #allocation5 [shape = 's32[2]{0}', space=sflag, size = 0x8, scoped, tag = 'scoped memory for tpu_custom_call.1']
    #allocation6 [shape = 's32[2]{0}', space=sflag, size = 0x8, scoped, tag = 'scoped memory for tpu_custom_call.1']
    #allocation7 [shape = 'u8[131072]{0}', space=vmem, size = 0x20000, scoped, tag = 'input window, operand 3']
    #allocation8 [shape = 's32[2]{0}', space=sflag, size = 0x8, scoped, tag = 'scoped memory for tpu_custom_call.1']
    #allocation9 [shape = 'u8[131072]{0}', space=vmem, size = 0x20000, scoped, tag = 'input window, operand 5']
    #allocation10 [shape = 'u8[8192]{0}', space=vmem, size = 0x2000, scoped, tag = 'output window, operand 0']
    %12 = vsyncpa [#allocation5], 0
    %s13 = scalar_lea.sflag [#allocation5], 1
    %14 = vsyncpa %s13, 0
    %15 = vsyncpa [#allocation8], 0
    %s16 = scalar_lea.sflag [#allocation8], 1
    %17 = vsyncpa %s16, 0
    %18 = vsyncpa [#allocation6], 0
    %s19 = scalar_lea.sflag [#allocation6], 1
    %20 = vsyncpa %s19, 0
    loop: start=0, step=1, limit=6
    $region2: #{tpu_custom_call.1} parent=1 // loop_pre_header
      _
    $region3: #{tpu_custom_call.1} parent=1 // loop_header
      %s22 = sphi 0, %s26
      %p23 = scmp.ge.s32.totalorder %s22, 6
      %s29 = sphi 0, %s41
      %s30 = sphi 0, %s37
      %s31 = sphi 0, %s29
      %s32 = sphi 0, %s30
      %s33 = sphi 0, %s31
      %s34 = sphi 0, %s32
      %s44 = sphi 0, %s46
      %s47 = sphi 0, %s44
      %s48 = sphi 0, %s47
      %s64 = sphi 0, %s48
      %s68 = sphi 0, %s68
      %s70 = sphi 0, %s68
      %s71 = sphi 0, %s70
      %s85 = sphi 0, %s71
      %s89 = sphi 0, %s89
      %s91 = sphi 0, %s89
      %s92 = sphi 0, %s91
      %s106 = sphi 0, %s92
      %s112 = sphi 0, %s114
      %s115 = sphi 0, %s112
      %s116 = sphi 0, %s115
      %s132 = sphi 0, %s116
      %s138 = sphi 0, %s140
      %s141 = sphi 0, %s138
      %s142 = sphi 0, %s141
      %s158 = sphi 0, %s142
      %s164 = sphi 0, %s166
      %s167 = sphi 0, %s164
      %s168 = sphi 0, %s167
      %s184 = sphi 0, %s168
      %s188 = sphi 0, %s188
      %s190 = sphi 0, %s188
      %s191 = sphi 0, %s190
      %s205 = sphi 0, %s191
      %s211 = sphi 0, %s213
      %s214 = sphi 0, %s211
      %s215 = sphi 0, %s214
      %s231 = sphi 0, %s215
    $region4: #{tpu_custom_call.1} parent=1 // loop_header_branch
      %25 = sbr.rel (%p23) target = $region8
    $region5: #{tpu_custom_call.1} parent=1 // loop_body
      %s27 = ssub.s32 %s22, 1
      %s28 = ssub.s32 %s22, 2
      %s35 = sadd.s32 1, %s30
      %p36 = scmp.ge.s32.totalorder %s35, 2
      %s37 = scalar_select %p36, 0, %s35
      %s38 = sadd.s32 1, %s29
      %s39 = scalar_select %p36, %s38, %s29
      %p40 = scmp.ge.s32.totalorder %s39, 2
      %s41 = scalar_select %p40, 0, %s39
      %s42 = ssub.s32 %s29, %s41
      %p43 = scmp.eq.s32.totalorder %s42, 0
      %s45 = sadd.s32 %s44, 1
      %s46 = scalar_select %p43, %s44, %s45
      %p49 = pneg %p43
      %p50 = scmp.eq.s32.totalorder %s22, 3
      %p51 = por %p49, %p50
      %p52 = scmp.ne.s32.totalorder %s44, %s47
      %p53 = scmp.eq.s32.totalorder %s22, 0
      %p54 = por %p52, %p53
      %p55 = scmp.ne.s32.totalorder %s44, %s47
      %p56 = scmp.eq.s32.totalorder %s27, 3
      %p57 = por %p55, %p56
      %p58 = scmp.ne.s32.totalorder %s47, %s48
      %p59 = scmp.eq.s32.totalorder %s27, 0
      %p60 = por %p58, %p59
      %p61 = scmp.ne.s32.totalorder %s47, %s48
      %p62 = scmp.eq.s32.totalorder %s28, 3
      %p63 = por %p61, %p62
      %p65 = scmp.ne.s32.totalorder %s48, %s64
      %p66 = scmp.eq.s32.totalorder %s28, 0
      %p67 = por %p65, %p66
      %s69 = sadd.s32 %s68, 1
      %p72 = scmp.eq.s32.totalorder %s22, 3
      %p73 = scmp.ne.s32.totalorder %s68, %s70
      %p74 = scmp.eq.s32.totalorder %s22, 0
      %p75 = por %p73, %p74
      %p76 = scmp.ne.s32.totalorder %s68, %s70
      %p77 = scmp.eq.s32.totalorder %s27, 3
      %p78 = por %p76, %p77
      %p79 = scmp.ne.s32.totalorder %s70, %s71
      %p80 = scmp.eq.s32.totalorder %s27, 0
      %p81 = por %p79, %p80
      %p82 = scmp.ne.s32.totalorder %s70, %s71
      %p83 = scmp.eq.s32.totalorder %s28, 3
      %p84 = por %p82, %p83
      %p86 = scmp.ne.s32.totalorder %s71, %s85
      %p87 = scmp.eq.s32.totalorder %s28, 0
      %p88 = por %p86, %p87
      %s90 = sadd.s32 %s89, 1
      %p93 = scmp.eq.s32.totalorder %s22, 3
      %p94 = scmp.ne.s32.totalorder %s89, %s91
      %p95 = scmp.eq.s32.totalorder %s22, 0
      %p96 = por %p94, %p95
      %p97 = scmp.ne.s32.totalorder %s89, %s91
      %p98 = scmp.eq.s32.totalorder %s27, 3
      %p99 = por %p97, %p98
      %p100 = scmp.ne.s32.totalorder %s91, %s92
      %p101 = scmp.eq.s32.totalorder %s27, 0
      %p102 = por %p100, %p101
      %p103 = scmp.ne.s32.totalorder %s91, %s92
      %p104 = scmp.eq.s32.totalorder %s28, 3
      %p105 = por %p103, %p104
      %p107 = scmp.ne.s32.totalorder %s92, %s106
      %p108 = scmp.eq.s32.totalorder %s28, 0
      %p109 = por %p107, %p108
      %s110 = ssub.s32 %s30, %s37
      %p111 = scmp.eq.s32.totalorder %s110, 0
      %s113 = sadd.s32 %s112, 1
      %s114 = scalar_select %p111, %s112, %s113
      %p117 = pneg %p111
      %p118 = scmp.eq.s32.totalorder %s22, 3
      %p119 = por %p117, %p118
      %p120 = scmp.ne.s32.totalorder %s112, %s115
      %p121 = scmp.eq.s32.totalorder %s22, 0
      %p122 = por %p120, %p121
      %p123 = scmp.ne.s32.totalorder %s112, %s115
      %p124 = scmp.eq.s32.totalorder %s27, 3
      %p125 = por %p123, %p124
      %p126 = scmp.ne.s32.totalorder %s115, %s116
      %p127 = scmp.eq.s32.totalorder %s27, 0
      %p128 = por %p126, %p127
      %p129 = scmp.ne.s32.totalorder %s115, %s116
      %p130 = scmp.eq.s32.totalorder %s28, 3
      %p131 = por %p129, %p130
      %p133 = scmp.ne.s32.totalorder %s116, %s132
      %p134 = scmp.eq.s32.totalorder %s28, 0
      %p135 = por %p133, %p134
      %s136 = ssub.s32 %s30, %s37
      %p137 = scmp.eq.s32.totalorder %s136, 0
      %s139 = sadd.s32 %s138, 1
      %s140 = scalar_select %p137, %s138, %s139
      %p143 = pneg %p137
      %p144 = scmp.eq.s32.totalorder %s22, 3
      %p145 = por %p143, %p144
      %p146 = scmp.ne.s32.totalorder %s138, %s141
      %p147 = scmp.eq.s32.totalorder %s22, 0
      %p148 = por %p146, %p147
      %p149 = scmp.ne.s32.totalorder %s138, %s141
      %p150 = scmp.eq.s32.totalorder %s27, 3
      %p151 = por %p149, %p150
      %p152 = scmp.ne.s32.totalorder %s141, %s142
      %p153 = scmp.eq.s32.totalorder %s27, 0
      %p154 = por %p152, %p153
      %p155 = scmp.ne.s32.totalorder %s141, %s142
      %p156 = scmp.eq.s32.totalorder %s28, 3
      %p157 = por %p155, %p156
      %p159 = scmp.ne.s32.totalorder %s142, %s158
      %p160 = scmp.eq.s32.totalorder %s28, 0
      %p161 = por %p159, %p160
      %s162 = ssub.s32 %s30, %s37
      %p163 = scmp.eq.s32.totalorder %s162, 0
      %s165 = sadd.s32 %s164, 1
      %s166 = scalar_select %p163, %s164, %s165
      %p169 = pneg %p163
      %p170 = scmp.eq.s32.totalorder %s22, 3
      %p171 = por %p169, %p170
      %p172 = scmp.ne.s32.totalorder %s164, %s167
      %p173 = scmp.eq.s32.totalorder %s22, 0
      %p174 = por %p172, %p173
      %p175 = scmp.ne.s32.totalorder %s164, %s167
      %p176 = scmp.eq.s32.totalorder %s27, 3
      %p177 = por %p175, %p176
      %p178 = scmp.ne.s32.totalorder %s167, %s168
      %p179 = scmp.eq.s32.totalorder %s27, 0
      %p180 = por %p178, %p179
      %p181 = scmp.ne.s32.totalorder %s167, %s168
      %p182 = scmp.eq.s32.totalorder %s28, 3
      %p183 = por %p181, %p182
      %p185 = scmp.ne.s32.totalorder %s168, %s184
      %p186 = scmp.eq.s32.totalorder %s28, 0
      %p187 = por %p185, %p186
      %s189 = sadd.s32 %s188, 1
      %p192 = scmp.eq.s32.totalorder %s22, 3
      %p193 = scmp.ne.s32.totalorder %s188, %s190
      %p194 = scmp.eq.s32.totalorder %s22, 0
      %p195 = por %p193, %p194
      %p196 = scmp.ne.s32.totalorder %s188, %s190
      %p197 = scmp.eq.s32.totalorder %s27, 3
      %p198 = por %p196, %p197
      %p199 = scmp.ne.s32.totalorder %s190, %s191
      %p200 = scmp.eq.s32.totalorder %s27, 0
      %p201 = por %p199, %p200
      %p202 = scmp.ne.s32.totalorder %s190, %s191
      %p203 = scmp.eq.s32.totalorder %s28, 3
      %p204 = por %p202, %p203
      %p206 = scmp.ne.s32.totalorder %s191, %s205
      %p207 = scmp.eq.s32.totalorder %s28, 0
      %p208 = por %p206, %p207
      %s209 = ssub.s32 %s29, %s41
      %p210 = scmp.eq.s32.totalorder %s209, 0
      %s212 = sadd.s32 %s211, 1
      %s213 = scalar_select %p210, %s211, %s212
      %p216 = pneg %p210
      %p217 = scmp.eq.s32.totalorder %s22, 3
      %p218 = por %p216, %p217
      %p219 = scmp.ne.s32.totalorder %s211, %s214
      %p220 = scmp.eq.s32.totalorder %s22, 0
      %p221 = por %p219, %p220
      %p222 = scmp.ne.s32.totalorder %s211, %s214
      %p223 = scmp.eq.s32.totalorder %s27, 3
      %p224 = por %p222, %p223
      %p225 = scmp.ne.s32.totalorder %s214, %s215
      %p226 = scmp.eq.s32.totalorder %s27, 0
      %p227 = por %p225, %p226
      %p228 = scmp.ne.s32.totalorder %s214, %s215
      %p229 = scmp.eq.s32.totalorder %s28, 3
      %p230 = por %p228, %p229
      %p232 = scmp.ne.s32.totalorder %s215, %s231
      %p233 = scmp.eq.s32.totalorder %s28, 0
      %p234 = por %p232, %p233
      %p235 = scmp.le.s32.totalorder 1, %s22
      %p236 = scmp.lt.s32.totalorder %s22, 5
      %p237 = pnand %p235, %p236
      %p238 = pneg %p237
      // Predicated region
      $region9: #{tpu_custom_call.1} parent=5 // pred_check
        _
      $region10: #{tpu_custom_call.1} parent=5 // pred_check_branch
        %240 = sbr.rel (%p237) target = $region12
      $region11: #{tpu_custom_call.1} parent=5 // pred_region
        %s241 = ssub.s32 %s22, 1
        // Predicated region
        $region13: #{tpu_custom_call.1} parent=11 // pred_check
          %p242 = pneg %p81
        $region14: #{tpu_custom_call.1} parent=11 // pred_check_branch
          %244 = sbr.rel (%p242) target = $region16
        $region15: #{tpu_custom_call.1} parent=11 // pred_region
          _
        $region16: #{tpu_custom_call.1} parent=11 // pred_fallthru
          _
        // Predicated region
        $region17: #{tpu_custom_call.1} parent=11 // pred_check
          %p245 = pneg %p102
        $region18: #{tpu_custom_call.1} parent=11 // pred_check_branch
          %247 = sbr.rel (%p245) target = $region20
        $region19: #{tpu_custom_call.1} parent=11 // pred_region
          _
        $region20: #{tpu_custom_call.1} parent=11 // pred_fallthru
          _
        // Predicated region
        $region21: #{tpu_custom_call.1} parent=11 // pred_check
          %p248 = pneg %p201
        $region22: #{tpu_custom_call.1} parent=11 // pred_check_branch
          %250 = sbr.rel (%p248) target = $region24
        $region23: #{tpu_custom_call.1} parent=11 // pred_region
          _
        $region24: #{tpu_custom_call.1} parent=11 // pred_fallthru
          _
      $region12: #{tpu_custom_call.1} parent=5 // pred_fallthru
        _
      %p251 = scmp.lt.s32.totalorder %s22, 4
      // Predicated region
      $region25: #{tpu_custom_call.1} parent=5 // pred_check
        %p252 = pneg %p251
      $region26: #{tpu_custom_call.1} parent=5 // pred_check_branch
        %254 = sbr.rel (%p252) target = $region28
      $region27: #{tpu_custom_call.1} parent=5 // pred_region
        // Predicated region
        $region29: #{tpu_custom_call.1} parent=27 // pred_check
          %p255 = pneg %p54
        $region30: #{tpu_custom_call.1} parent=27 // pred_check_branch
          %257 = sbr.rel (%p255) target = $region32
        $region31: #{tpu_custom_call.1} parent=27 // pred_region
          %s258 = sand.u32 %s44, 1
          %s259 = scalar_lea.sflag [#allocation5], %s258
          %s260 = sand.u32 %s44, 1
          %s261 = smul.addr %s260, 8
          %s262 = scalar_lea.vmem [#allocation4], %s261
          %s264 = ssub.s32 128, 128
          %265 = vsyncadd %s259, %s264
          %s266 = smul.addr %s29, 128
          %s267 = scalar_lea.hbm %s0, %s266
          %s269 = sshll.u32 %s262, 4
          %s270 = int_to_ptr.vmem [resolvable:$true] %s269
          %272 = dma.hbm_to_vmem [thread:$0]  %s267, 128, %s270, %s259
        $region32: #{tpu_custom_call.1} parent=27 // pred_fallthru
          _
        // Predicated region
        $region33: #{tpu_custom_call.1} parent=27 // pred_check
          %p273 = pneg %p122
        $region34: #{tpu_custom_call.1} parent=27 // pred_check_branch
          %275 = sbr.rel (%p273) target = $region36
        $region35: #{tpu_custom_call.1} parent=27 // pred_region
          %s276 = sand.u32 %s22, 1
          %s277 = scalar_lea.sflag [#allocation8], %s276
          %s278 = sand.u32 %s112, 1
          %s279 = smul.addr %s278, 128
          %s280 = scalar_lea.vmem [#allocation7], %s279
          %s282 = ssub.s32 2048, 2048
          %283 = vsyncadd %s277, %s282
          %s284 = smul.addr %s30, 128
          %s285 = scalar_lea.hbm %s3, %s284
          %s286 = sshll.u32 %s280, 4
          %s287 = int_to_ptr.vmem [resolvable:$true] %s286
          %292 = dma.hbm_to_vmem [thread:$0]  %s285, 2048, %s287, %s277, 256, 128, 8
        $region36: #{tpu_custom_call.1} parent=27 // pred_fallthru
          _
        // Predicated region
        $region37: #{tpu_custom_call.1} parent=27 // pred_check
          %p293 = pneg %p148
        $region38: #{tpu_custom_call.1} parent=27 // pred_check_branch
          %295 = sbr.rel (%p293) target = $region40
        $region39: #{tpu_custom_call.1} parent=27 // pred_region
          %p296 = scmp.lt.s32.totalorder %s30, 1
          %s297 = scalar_select %p296, %s30, 1
          %s298 = scalar_lea.vmem %s4, %s297
        $region40: #{tpu_custom_call.1} parent=27 // pred_fallthru
          _
        // Predicated region
        $region41: #{tpu_custom_call.1} parent=27 // pred_check
          %p299 = pneg %p174
        $region42: #{tpu_custom_call.1} parent=27 // pred_check_branch
          %301 = sbr.rel (%p299) target = $region44
        $region43: #{tpu_custom_call.1} parent=27 // pred_region
          %s302 = sand.u32 %s22, 1
          %s303 = scalar_lea.sflag [#allocation8], %s302
          %s304 = sand.u32 %s164, 1
          %s305 = smul.addr %s304, 128
          %s306 = scalar_lea.vmem [#allocation9], %s305
          %s307 = smul.u32 16, %s30
          %s309 = ssub.s32 2048, 2048
          %310 = vsyncadd %s303, %s309
          %s311 = smul.addr %s307, 128
          %s312 = scalar_lea.hbm %s5, %s311
          %s313 = sshll.u32 %s306, 4
          %s314 = int_to_ptr.vmem [resolvable:$true] %s313
          %319 = dma.hbm_to_vmem [thread:$0]  %s312, 2048, %s314, %s303, 128, 128, 8
        $region44: #{tpu_custom_call.1} parent=27 // pred_fallthru
          _
      $region28: #{tpu_custom_call.1} parent=5 // pred_fallthru
        _
      %p320 = scmp.le.s32.totalorder 1, %s22
      %p321 = scmp.lt.s32.totalorder %s22, 5
      %p322 = pnand %p320, %p321
      %p323 = pneg %p322
      // Predicated region
      $region45: #{tpu_custom_call.1} parent=5 // pred_check
        _
      $region46: #{tpu_custom_call.1} parent=5 // pred_check_branch
        %325 = sbr.rel (%p322) target = $region48
      $region47: #{tpu_custom_call.1} parent=5 // pred_region
        %s326 = ssub.s32 %s22, 1
        %s327 = sand.u32 %s47, 1
        %s328 = scalar_lea.sflag [#allocation5], %s327
        %s329 = sand.u32 %s47, 1
        %s330 = smul.addr %s329, 8
        %s331 = scalar_lea.vmem [#allocation4], %s330
        // Predicated region
        $region49: #{tpu_custom_call.1} parent=47 // pred_check
          %p332 = pneg %p60
        $region50: #{tpu_custom_call.1} parent=47 // pred_check_branch
          %334 = sbr.rel (%p332) target = $region52
        $region51: #{tpu_custom_call.1} parent=47 // pred_region
          %335 = dma.done %s328, 128
        $region52: #{tpu_custom_call.1} parent=47 // pred_fallthru
          _
        %s336 = sand.u32 %s27, 1
        %s337 = scalar_lea.sflag [#allocation8], %s336
        %s338 = sand.u32 %s115, 1
        %s339 = smul.addr %s338, 128
        %s340 = scalar_lea.vmem [#allocation7], %s339
        // Predicated region
        $region53: #{tpu_custom_call.1} parent=47 // pred_check
          %p341 = pneg %p128
        $region54: #{tpu_custom_call.1} parent=47 // pred_check_branch
          %343 = sbr.rel (%p341) target = $region56
        $region55: #{tpu_custom_call.1} parent=47 // pred_region
          %344 = dma.done %s337, 2048
        $region56: #{tpu_custom_call.1} parent=47 // pred_fallthru
          _
        %s345 = sand.u32 %s27, 1
        %s346 = scalar_lea.sflag [#allocation8], %s345
        %s347 = sand.u32 %s167, 1
        %s348 = smul.addr %s347, 128
        %s349 = scalar_lea.vmem [#allocation9], %s348
        // Predicated region
        $region57: #{tpu_custom_call.1} parent=47 // pred_check
          %p350 = pneg %p180
        $region58: #{tpu_custom_call.1} parent=47 // pred_check_branch
          %352 = sbr.rel (%p350) target = $region60
        $region59: #{tpu_custom_call.1} parent=47 // pred_region
          %353 = dma.done %s346, 2048
        $region60: #{tpu_custom_call.1} parent=47 // pred_fallthru
          _
        %s354 = sand.u32 %s47, 1
        %s355 = scalar_lea.sflag [#allocation5], %s354
        %s356 = sand.u32 %s47, 1
        %s357 = smul.addr %s356, 8
        %s358 = scalar_lea.vmem [#allocation4], %s357
        %p359 = pneg %p60
        %p360 = pneg %p57
        %p361 = pneg %p81
        %p362 = pneg %p78
        %p363 = pneg %p102
        %p364 = pneg %p99
        %s365 = sand.u32 %s27, 1
        %s366 = scalar_lea.sflag [#allocation8], %s365
        %s367 = sand.u32 %s115, 1
        %s368 = smul.addr %s367, 128
        %s369 = scalar_lea.vmem [#allocation7], %s368
        %p370 = pneg %p128
        %p371 = pneg %p125
        %p372 = scmp.lt.s32.totalorder %s32, 1
        %s373 = scalar_select %p372, %s32, 1
        %s374 = scalar_lea.vmem %s4, %s373
        %p375 = pneg %p154
        %p376 = pneg %p151
        %s377 = sand.u32 %s27, 1
        %s378 = scalar_lea.sflag [#allocation8], %s377
        %s379 = sand.u32 %s167, 1
        %s380 = smul.addr %s379, 128
        %s381 = scalar_lea.vmem [#allocation9], %s380
        %p382 = pneg %p180
        %p383 = pneg %p177
        %p384 = pneg %p201
        %p385 = pneg %p198
        %p386 = pneg %p227
        %p387 = pneg %p224
        %s388 = sand.u32 %s214, 1
        %s389 = scalar_lea.sflag [#allocation6], %s388
        %s390 = sand.u32 %s214, 1
        %s391 = smul.addr %s390, 8
        %s392 = scalar_lea.vmem [#allocation10], %s391
        %p393 = scmp.lt.s32.totalorder %s32, 1
        %s394 = scalar_select %p393, %s32, 1
        %s395 = scalar_lea.vmem %s4, %s394
        %s396 = smul.u32 16, %s32
        %p397 = scmp.eq.s32.totalorder %s32, 0
        // Predicated region
        $region61: #{tpu_custom_call.1} parent=47 // pred_check
          %p398 = pneg %p397
        $region62: #{tpu_custom_call.1} parent=47 // pred_check_branch
          %400 = sbr.rel (%p398) target = $region64
        $region63: #{tpu_custom_call.1} parent=47 // pred_region
          %v401 = vld [vmem:[%s331] sm:$0xff]
          %402 = vadd.xlane.f32.xlu0 %v401
          %v403 = vpop.xlane.xlu0 %402
          %v404 = vrcp.pop 128.0
          %v405 = vmul.f32 %v403, %v404
          %v406 = vsub.f32 %v401, %v405
          %v407 = vmul.f32 %v406, %v406
          %408 = vadd.xlane.f32.xlu0 %v407
          %v409 = vpop.xlane.xlu0 %408
          %v410 = vmul.f32 %v409, %v404
          %v411 = vadd.f32 %v410, 1e-05
          %v412 = vrsqrt.pop %v411
          %v413 = vmul.f32 %v406, %v412
          %v414 = vld [vmem:[%s1] sm:$0x1]
          %v416 = vlaneseq
          %v417 = vshrl.u32 %v416, 7
          %v418 = vsub.s32 0, %v417
          %v419 = vrot.slane %v414, %v418
          %v421 = vmul.f32 %v413, %v419
          %v422 = vld [vmem:[%s2] sm:$0x1]
          %v424 = vlaneseq
          %v425 = vshrl.u32 %v424, 7
          %v426 = vsub.s32 0, %v425
          %v427 = vrot.slane %v422, %v426
          %v429 = vadd.f32 %v421, %v427
          %430 = vst [vmem:[#allocation2] sm:$0xff] %v429
          %431 = vst [vmem:[#allocation3] sm:$0xff] 0.0
        $region64: #{tpu_custom_call.1} parent=47 // pred_fallthru
          _
        %v432 = vld [vmem:[#allocation2] sm:$0xff]
        %v433 = vld [vmem:[%s340] sm:$0xff]
        %v434 = vld [vmem:[%s340 + $0x8] sm:$0xff]
        %v435 = vld [vmem:[%s340 + $0x10] sm:$0xff]
        %v436 = vld [vmem:[%s340 + $0x18] sm:$0xff]
        %v437 = vld [vmem:[%s340 + $0x20] sm:$0xff]
        %v438 = vld [vmem:[%s340 + $0x28] sm:$0xff]
        %v439 = vld [vmem:[%s340 + $0x30] sm:$0xff]
        %v440 = vld [vmem:[%s340 + $0x38] sm:$0xff]
        %v441 = vld [vmem:[%s340 + $0x40] sm:$0xff]
        %v442 = vld [vmem:[%s340 + $0x48] sm:$0xff]
        %v443 = vld [vmem:[%s340 + $0x50] sm:$0xff]
        %v444 = vld [vmem:[%s340 + $0x58] sm:$0xff]
        %v445 = vld [vmem:[%s340 + $0x60] sm:$0xff]
        %v446 = vld [vmem:[%s340 + $0x68] sm:$0xff]
        %v447 = vld [vmem:[%s340 + $0x70] sm:$0xff]
        %v448 = vld [vmem:[%s340 + $0x78] sm:$0xff]
        %v449 = vld [vmem:[%s395] sm:$0x1]
        %v451 = vlaneseq
        %v452 = vshrl.u32 %v451, 7
        %v453 = vsub.s32 0, %v452
        %v454 = vrot.slane %v449, %v453
        %456 = vmatprep.subr.mxu0 0.0
        %457 = vmatpush1.msra.mxu0 %v433
        %458 = vmatprep.subr.mxu0 0.0
        %459 = vmatpush1.msra.mxu0 %v434
        %460 = vmatprep.subr.mxu0 0.0
        %461 = vmatpush1.msra.mxu0 %v435
        %462 = vmatprep.subr.mxu0 0.0
        %463 = vmatpush1.msra.mxu0 %v436
        %464 = vmatprep.subr.mxu0 0.0
        %465 = vmatpush1.msra.mxu0 %v437
        %466 = vmatprep.subr.mxu0 0.0
        %467 = vmatpush1.msra.mxu0 %v438
        %468 = vmatprep.subr.mxu0 0.0
        %469 = vmatpush1.msra.mxu0 %v439
        %470 = vmatprep.subr.mxu0 0.0
        %471 = vmatpush1.msra.mxu0 %v440
        %472 = vmatprep.subr.mxu0 0.0
        %473 = vmatpush1.msra.mxu0 %v441
        %474 = vmatprep.subr.mxu0 0.0
        %475 = vmatpush1.msra.mxu0 %v442
        %476 = vmatprep.subr.mxu0 0.0
        %477 = vmatpush1.msra.mxu0 %v443
        %478 = vmatprep.subr.mxu0 0.0
        %479 = vmatpush1.msra.mxu0 %v444
        %480 = vmatprep.subr.mxu0 0.0
        %481 = vmatpush1.msra.mxu0 %v445
        %482 = vmatprep.subr.mxu0 0.0
        %483 = vmatpush1.msra.mxu0 %v446
        %484 = vmatprep.subr.mxu0 0.0
        %485 = vmatpush1.msra.mxu0 %v447
        %486 = vmatprep.subr.mxu0 0.0
        %487 = vmatpush1.msra.mxu0 %v448
        %488 = vmatprep.subr.mxu0 0.0
        %489 = vmatpush1.msra.mxu0 0.0
        %490 = vmatprep.subr.mxu0 0.0
        %491 = vmatpush1.msra.mxu0 0.0
        %492 = vmatprep.subr.mxu0 0.0
        %493 = vmatpush1.msra.mxu0 0.0
        %494 = vmatprep.subr.mxu0 0.0
        %495 = vmatpush1.msra.mxu0 0.0
        %496 = vmatprep.subr.mxu0 0.0
        %497 = vmatpush1.msra.mxu0 0.0
        %498 = vmatprep.subr.mxu0 0.0
        %499 = vmatpush1.msra.mxu0 0.0
        %500 = vmatprep.subr.mxu0 0.0
        %501 = vmatpush1.msra.mxu0 0.0
        %502 = vmatprep.subr.mxu0 0.0
        %503 = vmatpush1.msra.mxu0 0.0
        %504 = vmatprep.subr.mxu0 0.0
        %505 = vmatpush1.msra.mxu0 0.0
        %506 = vmatprep.subr.mxu0 0.0
        %507 = vmatpush1.msra.mxu0 0.0
        %508 = vmatprep.subr.mxu0 0.0
        %509 = vmatpush1.msra.mxu0 0.0
        %510 = vmatprep.subr.mxu0 0.0
        %511 = vmatpush1.msra.mxu0 0.0
        %512 = vmatprep.subr.mxu0 0.0
        %513 = vmatpush1.msra.mxu0 0.0
        %514 = vmatprep.subr.mxu0 0.0
        %515 = vmatpush1.msra.mxu0 0.0
        %516 = vmatprep.subr.mxu0 0.0
        %517 = vmatpush1.msra.mxu0 0.0
        %518 = vmatprep.subr.mxu0 0.0
        %519 = vmatpush1.msra.mxu0 0.0
        %520 = vmatprep.mubr.f32.mxu0 0.0
        %521 = vmatmul.mubr.f32.gmra.mrb[0].mxu0 %v432
        %v522 = vpop.f32.mrb[0].mxu0
        %v523 = vadd.f32 %v454, %v522
        %v524 = vpop.f32.mrb[0].mxu0
        %525 = vdwg.mxu0
        %v526 = vmul.f32 %v523, 0.5
        %v527 = vmul.f32 %v523, 0.70710677
        %v528 = verf.f32.pop %v527
        %v529 = vadd.f32 %v528, 1.0
        %v530 = vmul.f32 %v526, %v529
        %v531 = vld [vmem:[#allocation3] sm:$0xff]
        %v532 = vld [vmem:[%s349] sm:$0xff]
        %v533 = vld [vmem:[%s349 + $0x8] sm:$0xff]
        %v534 = vld [vmem:[%s349 + $0x10] sm:$0xff]
        %v535 = vld [vmem:[%s349 + $0x18] sm:$0xff]
        %v536 = vld [vmem:[%s349 + $0x20] sm:$0xff]
        %v537 = vld [vmem:[%s349 + $0x28] sm:$0xff]
        %v538 = vld [vmem:[%s349 + $0x30] sm:$0xff]
        %v539 = vld [vmem:[%s349 + $0x38] sm:$0xff]
        %v540 = vld [vmem:[%s349 + $0x40] sm:$0xff]
        %v541 = vld [vmem:[%s349 + $0x48] sm:$0xff]
        %v542 = vld [vmem:[%s349 + $0x50] sm:$0xff]
        %v543 = vld [vmem:[%s349 + $0x58] sm:$0xff]
        %v544 = vld [vmem:[%s349 + $0x60] sm:$0xff]
        %v545 = vld [vmem:[%s349 + $0x68] sm:$0xff]
        %v546 = vld [vmem:[%s349 + $0x70] sm:$0xff]
        %v547 = vld [vmem:[%s349 + $0x78] sm:$0xff]
        %548 = vmatprep.subr.mxu0 0.0
        %549 = vmatpush1.msra.mxu0 %v532
        %550 = vmatprep.subr.mxu0 0.0
        %551 = vmatpush1.msra.mxu0 %v533
        %552 = vmatprep.subr.mxu0 0.0
        %553 = vmatpush1.msra.mxu0 %v534
        %554 = vmatprep.subr.mxu0 0.0
        %555 = vmatpush1.msra.mxu0 %v535
        %556 = vmatprep.subr.mxu0 0.0
        %557 = vmatpush1.msra.mxu0 %v536
        %558 = vmatprep.subr.mxu0 0.0
        %559 = vmatpush1.msra.mxu0 %v537
        %560 = vmatprep.subr.mxu0 0.0
        %561 = vmatpush1.msra.mxu0 %v538
        %562 = vmatprep.subr.mxu0 0.0
        %563 = vmatpush1.msra.mxu0 %v539
        %564 = vmatprep.subr.mxu0 0.0
        %565 = vmatpush1.msra.mxu0 %v540
        %566 = vmatprep.subr.mxu0 0.0
        %567 = vmatpush1.msra.mxu0 %v541
        %568 = vmatprep.subr.mxu0 0.0
        %569 = vmatpush1.msra.mxu0 %v542
        %570 = vmatprep.subr.mxu0 0.0
        %571 = vmatpush1.msra.mxu0 %v543
        %572 = vmatprep.subr.mxu0 0.0
        %573 = vmatpush1.msra.mxu0 %v544
        %574 = vmatprep.subr.mxu0 0.0
        %575 = vmatpush1.msra.mxu0 %v545
        %576 = vmatprep.subr.mxu0 0.0
        %577 = vmatpush1.msra.mxu0 %v546
        %578 = vmatprep.subr.mxu0 0.0
        %579 = vmatpush1.msra.mxu0 %v547
        %580 = vmatprep.subr.mxu0 0.0
        %581 = vmatpush1.msra.mxu0 0.0
        %582 = vmatprep.subr.mxu0 0.0
        %583 = vmatpush1.msra.mxu0 0.0
        %584 = vmatprep.subr.mxu0 0.0
        %585 = vmatpush1.msra.mxu0 0.0
        %586 = vmatprep.subr.mxu0 0.0
        %587 = vmatpush1.msra.mxu0 0.0
        %588 = vmatprep.subr.mxu0 0.0
        %589 = vmatpush1.msra.mxu0 0.0
        %590 = vmatprep.subr.mxu0 0.0
        %591 = vmatpush1.msra.mxu0 0.0
        %592 = vmatprep.subr.mxu0 0.0
        %593 = vmatpush1.msra.mxu0 0.0
        %594 = vmatprep.subr.mxu0 0.0
        %595 = vmatpush1.msra.mxu0 0.0
        %596 = vmatprep.subr.mxu0 0.0
        %597 = vmatpush1.msra.mxu0 0.0
        %598 = vmatprep.subr.mxu0 0.0
        %599 = vmatpush1.msra.mxu0 0.0
        %600 = vmatprep.subr.mxu0 0.0
        %601 = vmatpush1.msra.mxu0 0.0
        %602 = vmatprep.subr.mxu0 0.0
        %603 = vmatpush1.msra.mxu0 0.0
        %604 = vmatprep.subr.mxu0 0.0
        %605 = vmatpush1.msra.mxu0 0.0
        %606 = vmatprep.subr.mxu0 0.0
        %607 = vmatpush1.msra.mxu0 0.0
        %608 = vmatprep.subr.mxu0 0.0
        %609 = vmatpush1.msra.mxu0 0.0
        %610 = vmatprep.subr.mxu0 0.0
        %611 = vmatpush1.msra.mxu0 0.0
        %612 = vmatprep.mubr.f32.mxu0 0.0
        %613 = vmatmul.mubr.f32.gmra.mrb[0].mxu0 %v530
        %v614 = vpop.f32.mrb[0].mxu0
        %v615 = vadd.f32 0.0, %v614
        %v616 = vpop.f32.mrb[0].mxu0
        %617 = vdwg.mxu0
        %v618 = vadd.f32 %v531, %v615
        %619 = vst [vmem:[#allocation3] sm:$0xff] %v618
        %p620 = scmp.eq.s32.totalorder %s32, 1
        // Predicated region
        $region65: #{tpu_custom_call.1} parent=47 // pred_check
          %p621 = pneg %p620
        $region66: #{tpu_custom_call.1} parent=47 // pred_check_branch
          %623 = sbr.rel (%p621) target = $region68
        $region67: #{tpu_custom_call.1} parent=47 // pred_region
          %v624 = vld [vmem:[#allocation3] sm:$0xff]
          %v625 = vld [vmem:[%s6] sm:$0x1]
          %v627 = vlaneseq
          %v628 = vshrl.u32 %v627, 7
          %v629 = vsub.s32 0, %v628
          %v630 = vrot.slane %v625, %v629
          %v632 = vadd.f32 %v624, %v630
          %633 = vst [vmem:[%s392] sm:$0xff] %v632
        $region68: #{tpu_custom_call.1} parent=47 // pred_fallthru
          _
        %s634 = sand.u32 %s214, 1
        %s635 = scalar_lea.sflag [#allocation6], %s634
        %s636 = sand.u32 %s214, 1
        %s637 = smul.addr %s636, 8
        %s638 = scalar_lea.vmem [#allocation10], %s637
        // Predicated region
        $region69: #{tpu_custom_call.1} parent=47 // pred_check
          %p639 = pneg %p224
        $region70: #{tpu_custom_call.1} parent=47 // pred_check_branch
          %641 = sbr.rel (%p639) target = $region72
        $region71: #{tpu_custom_call.1} parent=47 // pred_region
          %s643 = ssub.s32 128, 128
          %644 = vsyncadd %s635, %s643
          %s645 = smul.addr %s31, 128
          %s646 = scalar_lea.hbm %s7, %s645
          %s648 = sshll.u32 %s638, 4
          %s649 = int_to_ptr.vmem [resolvable:$true] %s648
          %651 = dma.vmem_to_hbm [thread:$0]  %s649, 128, %s646, %s635
        $region72: #{tpu_custom_call.1} parent=47 // pred_fallthru
          _
      $region48: #{tpu_custom_call.1} parent=5 // pred_fallthru
        _
      %p652 = scmp.le.s32.totalorder 2, %s22
      // Predicated region
      $region73: #{tpu_custom_call.1} parent=5 // pred_check
        %p653 = pneg %p652
      $region74: #{tpu_custom_call.1} parent=5 // pred_check_branch
        %655 = sbr.rel (%p653) target = $region76
      $region75: #{tpu_custom_call.1} parent=5 // pred_region
        %s656 = ssub.s32 %s22, 2
        // Predicated region
        $region77: #{tpu_custom_call.1} parent=75 // pred_check
          %p657 = pneg %p230
        $region78: #{tpu_custom_call.1} parent=75 // pred_check_branch
          %659 = sbr.rel (%p657) target = $region80
        $region79: #{tpu_custom_call.1} parent=75 // pred_region
          %s660 = sand.u32 %s215, 1
          %s661 = scalar_lea.sflag [#allocation6], %s660
          %s662 = sand.u32 %s215, 1
          %s663 = smul.addr %s662, 8
          %s664 = scalar_lea.vmem [#allocation10], %s663
          %665 = dma.done %s661, 128
        $region80: #{tpu_custom_call.1} parent=75 // pred_fallthru
          _
      $region76: #{tpu_custom_call.1} parent=5 // pred_fallthru
        _
    $region6: #{tpu_custom_call.1} parent=1 // loop_footer
      %s26 = sadd.s32 1, %s22
    $region7: #{tpu_custom_call.1} parent=1 // loop_footer_branch
      %21 = sbr.rel target = $region3
    $region8: #{tpu_custom_call.1} parent=1 // loop_exit
      _
    %666 = vsyncpa [#allocation5], 1
    %s667 = scalar_lea.sflag [#allocation5], 1
    %668 = vsyncpa %s667, 1
    %669 = vsyncpa [#allocation8], 1
    %s670 = scalar_lea.sflag [#allocation8], 1
    %671 = vsyncpa %s670, 1
    %672 = vsyncpa [#allocation6], 1
    %s673 = scalar_lea.sflag [#allocation6], 1
    %674 = vsyncpa %s673, 1

</llo_original>
